<compile_context>
chip_gen: v7x
topology: tpu7x:2x2x1
jax: 0.10.0
libtpu: 0.0.40
codegen_flags: <defaults>
</compile_context>

<pallas_src>
import functools
import math

import jax
import jax.numpy as jnp
from jax.experimental import pallas as pl
from jax.experimental.pallas import tpu as pltpu


def _arcface_kernel(x_ref, wt_ref, invx_ref, invw_ref, lbl_ref, o_ref, *,
                    tn, cos_m, sin_m, scale):
    # x_ref   : (tm, K)  bf16  raw input rows
    # wt_ref  : (K, tn)  bf16  raw weight.T tile (classes on the lane axis)
    # invx_ref: (tm, 1)  f32   1 / max(||x_row||, 1e-12)
    # invw_ref: (1, tn)  f32   1 / max(||w_col||, 1e-12)
    # lbl_ref : (tm, 1)  i32   labels for these rows
    # o_ref   : (tm, tn) f32   output logits tile
    raw = jnp.dot(x_ref[...], wt_ref[...], preferred_element_type=jnp.float32)
    cosine = raw * invx_ref[...] * invw_ref[...]                 # (tm, tn)

    sine = jnp.sqrt(1.001 - cosine * cosine)
    phi = cosine * cos_m - sine * sin_m
    phi = jnp.where(cosine > 0.0, phi, cosine)                   # easy margin

    # one_hot: lane-local class ids vs. offset-shifted labels (no full int tile).
    col = jax.lax.broadcasted_iota(jnp.int32, (1, tn), 1)        # (1, tn)
    lbl_local = lbl_ref[...] - pl.program_id(0) * tn             # (tm, 1)
    is_target = col == lbl_local                                 # (tm, tn) bcast

    o_ref[...] = jnp.where(is_target, phi, cosine) * scale


def _round_up(v, m):
    return ((v + m - 1) // m) * m


def arcface_forward(x, weight, label, *, m=0.5, scale=64.0):
    """x: (B, K) f32; weight: (N, K) f32 (PyTorch Linear layout); label: (B,) int."""
    B, K = x.shape
    N, K2 = weight.shape
    assert K == K2, "in_features mismatch"

    cos_m = math.cos(m)
    sin_m = math.sin(m)

    # Inverse L2 norms, computed once in f32 outside the tile loop.
    inv_x = jax.lax.rsqrt(jnp.maximum(jnp.sum(x * x, axis=1, keepdims=True), 1e-24))
    inv_w = jax.lax.rsqrt(jnp.maximum(jnp.sum(weight * weight, axis=1), 1e-24))
    inv_w = inv_w.reshape(1, N)

    # bf16 MXU operands; weight presented as (K, N) so classes ride the lane axis.
    # TODO(synk): in a training loop keep the weight persistently in (K, N) bf16
    # to avoid this per-call transpose/cast pass over the full parameter.
    x_bf = x.astype(jnp.bfloat16)
    wt_bf = weight.T.astype(jnp.bfloat16)
    lbl = label.astype(jnp.int32).reshape(B, 1)

    # Sublane/lane-aligned tiles; pad to tile multiples (no full-extent fallback).
    tm = min(512, _round_up(B, 8))
    tn = min(1024, _round_up(N, 128))
    B_pad = _round_up(B, tm)
    N_pad = _round_up(N, tn)

    x_bf = jnp.pad(x_bf, ((0, B_pad - B), (0, 0)))
    wt_bf = jnp.pad(wt_bf, ((0, 0), (0, N_pad - N)))
    inv_x = jnp.pad(inv_x, ((0, B_pad - B), (0, 0)), constant_values=1.0)
    inv_w = jnp.pad(inv_w, ((0, 0), (0, N_pad - N)), constant_values=1.0)
    lbl = jnp.pad(lbl, ((0, B_pad - B), (0, 0)), constant_values=-1)

    # Class tiles outer (megacore-sharded -> disjoint weight halves per TC),
    # batch tiles inner (weight tile index unchanged -> stays resident in VMEM,
    # only the small x stream is re-read).
    grid = (N_pad // tn, B_pad // tm)

    # Double-buffered per-block footprint + headroom; generation-aware cap.
    block_bytes = 2 * (2 * tm * K + 2 * K * tn + 4 * tm * tn + 4 * tm + 4 * tn + 4 * tm)
    try:
        vmem_cap = getattr(pltpu.get_tpu_info(), "vmem_capacity_bytes", 128 << 20)
    except Exception:
        vmem_cap = 64 << 20
    vmem_limit = int(min(int(0.75 * vmem_cap), max(32 << 20, block_bytes + (4 << 20))))

    cost = pl.CostEstimate(
        flops=int(2 * B_pad * N_pad * K + 10 * B_pad * N_pad),
        transcendentals=int(B_pad * N_pad),
        bytes_accessed=int(2 * K * N_pad + 2 * B_pad * K * (N_pad // tn)
                           + 4 * B_pad * N_pad + 4 * (2 * B_pad + N_pad)),
    )

    kernel = functools.partial(
        _arcface_kernel, tn=tn, cos_m=cos_m, sin_m=sin_m, scale=scale
    )

    out = pl.pallas_call(
        kernel,
        out_shape=jax.ShapeDtypeStruct((B_pad, N_pad), jnp.float32),
        grid_spec=pltpu.PrefetchScalarGridSpec(
            num_scalar_prefetch=0,
            grid=grid,
            in_specs=[
                pl.BlockSpec((tm, K), lambda j, i: (i, 0)),      # x rows (bf16)
                pl.BlockSpec((K, tn), lambda j, i: (0, j)),      # weight.T tile (bf16)
                pl.BlockSpec((tm, 1), lambda j, i: (i, 0)),      # inverse row norms
                pl.BlockSpec((1, tn), lambda j, i: (0, j)),      # inverse col norms
                pl.BlockSpec((tm, 1), lambda j, i: (i, 0)),      # labels
            ],
            out_specs=pl.BlockSpec((tm, tn), lambda j, i: (i, j)),
        ),
        compiler_params=pltpu.CompilerParams(
            dimension_semantics=("parallel", "parallel"),
            vmem_limit_bytes=vmem_limit,
        ),
        cost_estimate=cost,
    )(x_bf, wt_bf, inv_x, inv_w, lbl)

    return out[:B, :N]


def arcface_reference(x, weight, label, *, m=0.5, scale=64.0):
    """Pure-JAX f32 reference matching the PyTorch module."""
    xn = x / jnp.maximum(jnp.sqrt(jnp.sum(x * x, axis=1, keepdims=True)), 1e-12)
    wn = weight / jnp.maximum(
        jnp.sqrt(jnp.sum(weight * weight, axis=1, keepdims=True)), 1e-12
    )
    cosine = jnp.dot(xn, wn.T, precision=jax.lax.Precision.HIGHEST)
    sine = jnp.sqrt(1.001 - cosine * cosine)
    phi = cosine * math.cos(m) - sine * math.sin(m)
    phi = jnp.where(cosine > 0.0, phi, cosine)
    one_hot = jax.nn.one_hot(label, weight.shape[0], dtype=cosine.dtype)
    return (one_hot * phi + (1.0 - one_hot) * cosine) * scale


if __name__ == "__main__":
    # Small shapes consistent with the module: batch=2, in_features=32, classes=16.
    B, IN_F, OUT_F = 2, 32, 16

    key = jax.random.PRNGKey(0)
    kx, kw, kl = jax.random.split(key, 3)
    x = jax.random.normal(kx, (B, IN_F), dtype=jnp.float32)
    weight = jax.random.normal(kw, (OUT_F, IN_F), dtype=jnp.float32)  # torch.randn(out, in)
    label = jax.random.randint(kl, (B,), 0, OUT_F, dtype=jnp.int32)

    out = arcface_forward(x, weight, label)
    jax.block_until_ready(out)

    ref = arcface_reference(x, weight, label)
    assert out.shape == (B, OUT_F)
    max_err = float(jnp.max(jnp.abs(out - ref)))
    # Tolerance loosened vs. the pure-f32 version because the dot now runs with
    # bf16 MXU operands (f32 accumulate); structural bugs would show errors >> 1
    # on the scale-64 logits.
    assert jnp.allclose(out, ref, atol=1.0, rtol=2e-2), max_err

    print("KERNEL_OK")
</pallas_src>

<mosaic_0001>
module attributes {stable_mosaic.version = 11 : i64} {
  func.func @_arcface_kernel(%arg0: i32, %arg1: i32, %arg2: memref<8x32xbf16, #tpu.memory_space<vmem>>, %arg3: memref<32x128xbf16, #tpu.memory_space<vmem>>, %arg4: memref<8x1xf32, #tpu.memory_space<vmem>>, %arg5: memref<1x128xf32, #tpu.memory_space<vmem>>, %arg6: memref<8x1xi32, #tpu.memory_space<vmem>>, %arg7: memref<8x128xf32, #tpu.memory_space<vmem>>) attributes {dimension_semantics = [#tpu.dimension_semantics<parallel>, #tpu.dimension_semantics<parallel>], iteration_bounds = array<i64: 1, 1>, scalar_prefetch = 0 : i64, scratch_operands = 0 : i64, tpu.core_type = #tpu.core_type<tc>, window_params = [{transform_indices = @transform_0, window_bounds = array<i64: 8, 32>}, {transform_indices = @transform_1, window_bounds = array<i64: 32, 128>}, {transform_indices = @transform_2, window_bounds = array<i64: 8, 1>}, {transform_indices = @transform_3, window_bounds = array<i64: 1, 128>}, {transform_indices = @transform_4, window_bounds = array<i64: 8, 1>}, {transform_indices = @transform_5, window_bounds = array<i64: 8, 128>}]} {
    %c0 = arith.constant 0 : index
    %c0_0 = arith.constant 0 : index
    %0 = vector.load %arg2[%c0, %c0_0] : memref<8x32xbf16, #tpu.memory_space<vmem>>, vector<8x32xbf16>
    %c0_1 = arith.constant 0 : index
    %c0_2 = arith.constant 0 : index
    %1 = vector.load %arg3[%c0_1, %c0_2] : memref<32x128xbf16, #tpu.memory_space<vmem>>, vector<32x128xbf16>
    %cst = arith.constant dense<0.000000e+00> : vector<8x128xf32>
    %2 = tpu.matmul %0, %1, %cst {dimension_numbers = #tpu.dot_dimension_numbers<[1], [0], [0], [1], [0, 0, 1, 1], [], []>} : vector<8x32xbf16>, vector<32x128xbf16>, vector<8x128xf32> -> vector<8x128xf32>
    %c0_3 = arith.constant 0 : index
    %c0_4 = arith.constant 0 : index
    %3 = vector.load %arg4[%c0_3, %c0_4] : memref<8x1xf32, #tpu.memory_space<vmem>>, vector<8x1xf32>
    %4 = vector.broadcast %3 : vector<8x1xf32> to vector<8x128xf32>
    %5 = arith.mulf %2, %4 : vector<8x128xf32>
    %c0_5 = arith.constant 0 : index
    %c0_6 = arith.constant 0 : index
    %6 = vector.load %arg5[%c0_5, %c0_6] : memref<1x128xf32, #tpu.memory_space<vmem>>, vector<1x128xf32>
    %7 = vector.broadcast %6 : vector<1x128xf32> to vector<8x128xf32>
    %8 = arith.mulf %5, %7 : vector<8x128xf32>
    %9 = arith.mulf %8, %8 : vector<8x128xf32>
    %cst_7 = arith.constant 1.001000e+00 : f32
    %10 = vector.broadcast %cst_7 : f32 to vector<8x128xf32>
    %11 = arith.subf %10, %9 : vector<8x128xf32>
    %12 = math.sqrt %11 : vector<8x128xf32>
    %cst_8 = arith.constant 0.87758255 : f32
    %13 = vector.broadcast %cst_8 : f32 to vector<8x128xf32>
    %14 = arith.mulf %8, %13 : vector<8x128xf32>
    %cst_9 = arith.constant 0.47942555 : f32
    %15 = vector.broadcast %cst_9 : f32 to vector<8x128xf32>
    %16 = arith.mulf %12, %15 : vector<8x128xf32>
    %17 = arith.subf %14, %16 : vector<8x128xf32>
    %cst_10 = arith.constant 0.000000e+00 : f32
    %18 = vector.broadcast %cst_10 : f32 to vector<8x128xf32>
    %19 = arith.cmpf ogt, %8, %18 : vector<8x128xf32>
    %20 = arith.select %19, %17, %8 : vector<8x128xi1>, vector<8x128xf32>
    %21 = tpu.iota {dimensions = array<i32: 1>} : vector<1x128xi32>
    %c0_11 = arith.constant 0 : index
    %c0_12 = arith.constant 0 : index
    %22 = vector.load %arg6[%c0_11, %c0_12] : memref<8x1xi32, #tpu.memory_space<vmem>>, vector<8x1xi32>
    %c128_i32 = arith.constant 128 : i32
    %23 = arith.muli %arg0, %c128_i32 : i32
    %24 = vector.broadcast %23 : i32 to vector<8x1xi32>
    %25 = arith.subi %22, %24 : vector<8x1xi32>
    %26 = vector.broadcast %21 : vector<1x128xi32> to vector<8x128xi32>
    %27 = vector.broadcast %25 : vector<8x1xi32> to vector<8x128xi32>
    %28 = arith.cmpi eq, %26, %27 : vector<8x128xi32>
    %29 = arith.select %28, %20, %8 : vector<8x128xi1>, vector<8x128xf32>
    %cst_13 = arith.constant 6.400000e+01 : f32
    %30 = vector.broadcast %cst_13 : f32 to vector<8x128xf32>
    %31 = arith.mulf %29, %30 : vector<8x128xf32>
    %c0_14 = arith.constant 0 : index
    %c0_15 = arith.constant 0 : index
    %32 = vector.load %arg7[%c0_14, %c0_15] : memref<8x128xf32, #tpu.memory_space<vmem>>, vector<8x128xf32>
    tpu.vector_store %arg7[%c0_14, %c0_15], %31 {strides = array<i32>} : memref<8x128xf32, #tpu.memory_space<vmem>>, vector<8x128xf32>,
    return
  }
  func.func @transform_0(%arg0: i32, %arg1: i32) -> (i32, i32) {
    %c0_i32 = arith.constant 0 : i32
    %c0_i32_0 = arith.constant 0 : i32
    return %arg1, %c0_i32 : i32, i32
  }
  func.func @transform_1(%arg0: i32, %arg1: i32) -> (i32, i32) {
    %c0_i32 = arith.constant 0 : i32
    %c0_i32_0 = arith.constant 0 : i32
    return %c0_i32, %arg0 : i32, i32
  }
  func.func @transform_2(%arg0: i32, %arg1: i32) -> (i32, i32) {
    %c0_i32 = arith.constant 0 : i32
    %c0_i32_0 = arith.constant 0 : i32
    return %arg1, %c0_i32 : i32, i32
  }
  func.func @transform_3(%arg0: i32, %arg1: i32) -> (i32, i32) {
    %c0_i32 = arith.constant 0 : i32
    %c0_i32_0 = arith.constant 0 : i32
    return %c0_i32, %arg0 : i32, i32
  }
  func.func @transform_4(%arg0: i32, %arg1: i32) -> (i32, i32) {
    %c0_i32 = arith.constant 0 : i32
    %c0_i32_0 = arith.constant 0 : i32
    return %arg1, %c0_i32 : i32, i32
  }
  func.func @transform_5(%arg0: i32, %arg1: i32) -> (i32, i32) {
    %c0_i32 = arith.constant 0 : i32
    return %arg1, %arg0 : i32, i32
  }
}

</mosaic_0001>

<llo_original>
// kernel: tpu_custom_call.1
$region0: #{tpu_custom_call.1}
  #allocation0 [shape = 'u32[]', space=smem, size = 0x4, offset = 0x4, fixed_abs, tag = 'smem constant byte address 0x4 - core index']
  #allocation1 [shape = 'u32[144,128]{1,0:T(1,128)}', space=vmem, size = 0x12000, scoped, tag = 'internal scratch']
  %s0 = inlined_call_operand.vmem [shape: bf16[8,32], index: 0, kind: input, shape index: {}]
  %s1 = inlined_call_operand.vmem [shape: bf16[32,128], index: 1, kind: input, shape index: {}]
  %s2 = inlined_call_operand.vmem [shape: f32[8,1], index: 2, kind: input, shape index: {}]
  %s3 = inlined_call_operand.vmem [shape: f32[1,128], index: 3, kind: input, shape index: {}]
  %s4 = inlined_call_operand.vmem [shape: s32[8,1], index: 4, kind: input, shape index: {}]
  %s5 = inlined_call_operand.hbm [shape: f32[8,128], index: 5, kind: output, shape index: {}]
  %s6 = sld [smem:[#allocation0]]
  $region30: #{tpu_custom_call.1} parent=0
    _
  %s8 = ssub.s32 1, %s6
  %s9 = scalar_select 0, %s8, %s6
  $region1: #{tpu_custom_call.1} parent=0
    #allocation2 [shape = 'u8[4096]{0}', space=vmem, size = 0x1000, scoped, tag = 'output window, operand 0, single buffered']
    #allocation3 [shape = 's32[1]{0}', space=sflag, size = 0x4, scoped, tag = 'scoped memory for tpu_custom_call.1']
    %10 = vsyncpa [#allocation3], 0
    // Predicated region
    $region2: #{tpu_custom_call.1} parent=1 // pred_check
      _
    $region3: #{tpu_custom_call.1} parent=1 // pred_check_branch
      %12 = sbr.rel (0) target = $region5
    $region4: #{tpu_custom_call.1} parent=1 // pred_region
      _
    $region5: #{tpu_custom_call.1} parent=1 // pred_fallthru
      _
    // Predicated region
    $region6: #{tpu_custom_call.1} parent=1 // pred_check
      _
    $region7: #{tpu_custom_call.1} parent=1 // pred_check_branch
      %14 = sbr.rel (0) target = $region9
    $region8: #{tpu_custom_call.1} parent=1 // pred_region
      _
    $region9: #{tpu_custom_call.1} parent=1 // pred_fallthru
      _
    // Predicated region
    $region10: #{tpu_custom_call.1} parent=1 // pred_check
      _
    $region11: #{tpu_custom_call.1} parent=1 // pred_check_branch
      %16 = sbr.rel (0) target = $region13
    $region12: #{tpu_custom_call.1} parent=1 // pred_region
      _
    $region13: #{tpu_custom_call.1} parent=1 // pred_fallthru
      _
    // Predicated region
    $region14: #{tpu_custom_call.1} parent=1 // pred_check
      _
    $region15: #{tpu_custom_call.1} parent=1 // pred_check_branch
      %18 = sbr.rel (0) target = $region17
    $region16: #{tpu_custom_call.1} parent=1 // pred_region
      _
    $region17: #{tpu_custom_call.1} parent=1 // pred_fallthru
      _
    // Predicated region
    $region18: #{tpu_custom_call.1} parent=1 // pred_check
      _
    $region19: #{tpu_custom_call.1} parent=1 // pred_check_branch
      %20 = sbr.rel (0) target = $region21
    $region20: #{tpu_custom_call.1} parent=1 // pred_region
      _
    $region21: #{tpu_custom_call.1} parent=1 // pred_fallthru
      _
    %v22 = vld [vmem:[%s0] sm:$0xf]
    %v23 = vld [vmem:[%s1] sm:$0xf]
    %v24 = vld [vmem:[%s1 + $0x4] sm:$0xf]
    %v25 = vld [vmem:[%s1 + $0x8] sm:$0xf]
    %v26 = vld [vmem:[%s1 + $0xc] sm:$0xf]
    %v31 = vunpack.c.l.b16 %v23
    %v32 = vunpack.c.l.b16 %v24
    %v33 = vunpack.c.l.b16 %v25
    %v34 = vunpack.c.l.b16 %v26
    %v35 = vpack.c.b16 %v32, %v31
    %v36 = vpack.c.b16 %v34, %v33
    %vm39 = vcmask 261120
    %v41 = vsel %vm39, %v22, 0
    %43 = vmatprep.subr.bf16.mxu0 0
    %44 = vmatpush1.bf16.msra.mxu0 %v35
    %45 = vmatprep.subr.bf16.mxu0 0
    %46 = vmatpush1.bf16.msra.mxu0 %v36
    %47 = vmatprep.subr.bf16.mxu0 0
    %48 = vmatpush1.bf16.msra.mxu0 0
    %49 = vmatprep.subr.bf16.mxu0 0
    %50 = vmatpush1.bf16.msra.mxu0 0
    %51 = vmatprep.subr.bf16.mxu0 0
    %52 = vmatpush1.bf16.msra.mxu0 0
    %53 = vmatprep.subr.bf16.mxu0 0
    %54 = vmatpush1.bf16.msra.mxu0 0
    %55 = vmatprep.subr.bf16.mxu0 0
    %56 = vmatpush1.bf16.msra.mxu0 0
    %57 = vmatprep.subr.bf16.mxu0 0
    %58 = vmatpush1.bf16.msra.mxu0 0
    %59 = vmatprep.subr.bf16.mxu0 0
    %60 = vmatpush1.bf16.msra.mxu0 0
    %61 = vmatprep.subr.bf16.mxu0 0
    %62 = vmatpush1.bf16.msra.mxu0 0
    %63 = vmatprep.subr.bf16.mxu0 0
    %64 = vmatpush1.bf16.msra.mxu0 0
    %65 = vmatprep.subr.bf16.mxu0 0
    %66 = vmatpush1.bf16.msra.mxu0 0
    %67 = vmatprep.subr.bf16.mxu0 0
    %68 = vmatpush1.bf16.msra.mxu0 0
    %69 = vmatprep.subr.bf16.mxu0 0
    %70 = vmatpush1.bf16.msra.mxu0 0
    %71 = vmatprep.subr.bf16.mxu0 0
    %72 = vmatpush1.bf16.msra.mxu0 0
    %73 = vmatprep.subr.bf16.mxu0 0
    %74 = vmatpush1.bf16.msra.mxu0 0
    %75 = vmatprep.mubr.bf16.mxu0 0
    %76 = vmatmul.mubr.bf16.gmra.mrb[0].mxu0 %v41
    %v77 = vpop.f32.mrb[0].mxu0
    %v78 = vadd.f32 0.0, %v77
    %v79 = vpop.f32.mrb[0].mxu0
    %v80 = vpop.f32.mrb[0].mxu0
    %v81 = vpop.f32.mrb[0].mxu0
    %82 = vdwg.mxu0
    %v83 = vld [vmem:[%s2] sm:$0xff]
    %85 = vset.pattern.permute.xlu0 0
    %86 = vperm.xlu0 %85, %v83
    %v87 = vpop.permute.xlu0 %86
    %v89 = vmul.f32 %v78, %v87
    %v90 = vld [vmem:[%s3] sm:$0x1]
    %v92 = vlaneseq
    %v93 = vshrl.u32 %v92, 7
    %v94 = vsub.s32 0, %v93
    %v95 = vrot.slane %v90, %v94
    %v97 = vmul.f32 %v89, %v95
    %v98 = vmul.f32 %v97, %v97
    %v99 = vsub.f32 1.001, %v98
    %v100 = vrsqrt.pop %v99
    %v101 = vmul.f32 %v99, %v100
    %vm102 = vcmp.eq.f32.partialorder %v99, inf
    %v103 = vsel %vm102, %v99, %v101
    %vm104 = vcmp.eq.f32.partialorder %v99, 0.0
    %v105 = vand.u32 %v99, 2147483648
    %v106 = vsel %vm104, %v105, %v103
    %v107 = vmul.f32 %v97, 0.87758255
    %v108 = vmul.f32 %v106, 0.47942555
    %v109 = vsub.f32 %v107, %v108
    %vm110 = vcmp.gt.f32.partialorder %v97, 0.0
    %v111 = vsel %vm110, %v109, %v97
    %v112 = vlaneseq
    %v113 = vand.u32 %v112, 127
    %v114 = vld [vmem:[%s4] sm:$0xff]
    %s115 = smul.u32 0, 128
    %v116 = vstv %s115
    %v117 = vsub.s32 %v114, %v116
    %118 = vset.pattern.permute.xlu0 0
    %119 = vperm.xlu0 %118, %v117
    %v120 = vpop.permute.xlu0 %119
    %vm121 = vcmp.eq.s32.totalorder %v113, %v120
    %v122 = vsel %vm121, %v111, %v97
    %v123 = vmul.f32 %v122, 64.0
    %124 = vst [vmem:[#allocation2] sm:$0xff] %v123
    // Predicated region
    $region22: #{tpu_custom_call.1} parent=1 // pred_check
      _
    $region23: #{tpu_custom_call.1} parent=1 // pred_check_branch
      %126 = sbr.rel (0) target = $region25
    $region24: #{tpu_custom_call.1} parent=1 // pred_region
      %s128 = ssub.s32 128, 128
      %129 = vsyncadd [#allocation3], %s128
      %s131 = sshll.u32 [#allocation2], 4
      %s132 = int_to_ptr.vmem [resolvable:$true] %s131
      %134 = dma.vmem_to_hbm [thread:$0]  %s132, 128, %s5, [#allocation3]
    $region25: #{tpu_custom_call.1} parent=1 // pred_fallthru
      _
    // Predicated region
    $region26: #{tpu_custom_call.1} parent=1 // pred_check
      _
    $region27: #{tpu_custom_call.1} parent=1 // pred_check_branch
      %136 = sbr.rel (0) target = $region29
    $region28: #{tpu_custom_call.1} parent=1 // pred_region
      %137 = dma.done [#allocation3], 128
    $region29: #{tpu_custom_call.1} parent=1 // pred_fallthru
      _
    %138 = vsyncpa [#allocation3], 1

</llo_original>
